<compile_context>
chip_gen: v5e
topology: v5e:2x2
jax: 0.10.0
libtpu: 0.0.40
codegen_flags: <defaults>
</compile_context>

<pallas_src>
import math
import functools

import jax
import jax.numpy as jnp
from jax import lax
from jax.experimental import pallas as pl
from jax.experimental.pallas import tpu as pltpu


# ----------------------------------------------------------------------------
# Kernel: one grid step handles `batch_block` batch elements end-to-end.
# ----------------------------------------------------------------------------
def attention_kernel(q_ref, k_ref, v_ref,
                     wq_ref, bq_ref, wk_ref, bk_ref, wv_ref, bv_ref,
                     wo_ref, bo_ref, out_ref,
                     *, num_heads, head_dim, batch_block):
    # Weights arrive pre-transposed from the wrapper:
    #   wq_ref / wk_ref / wv_ref : (E, internal_dim)   == W.T
    #   wo_ref                   : (internal_dim, E)   == Wo.T
    wq_t = wq_ref[...]
    wk_t = wk_ref[...]
    wv_t = wv_ref[...]
    wo_t = wo_ref[...]
    bq = bq_ref[...]
    bk = bk_ref[...]
    bv = bv_ref[...]
    bo = bo_ref[...]

    scale = 1.0 / math.sqrt(head_dim)
    # Contract the last dim of both operands: computes q @ k.T without an
    # explicit transpose of k.
    qk_dims = (((1,), (1,)), ((), ()))

    for b in range(batch_block):                       # static unroll over batch block
        q = q_ref[b]                                   # (Nq, E)
        k = k_ref[b]                                   # (Nk, E)
        v = v_ref[b]                                   # (Nk, E)

        # Linear projections (PyTorch Linear: y = x @ W.T + b)
        qp = jnp.dot(q, wq_t, preferred_element_type=jnp.float32) + bq
        kp = jnp.dot(k, wk_t, preferred_element_type=jnp.float32) + bk
        vp = jnp.dot(v, wv_t, preferred_element_type=jnp.float32) + bv

        heads = []
        for h in range(num_heads):                     # static unroll over heads
            sl = slice(h * head_dim, (h + 1) * head_dim)
            qh = qp[:, sl] * scale                     # (Nq, d)
            kh = kp[:, sl]                             # (Nk, d)
            vh = vp[:, sl]                             # (Nk, d)

            s = lax.dot_general(qh, kh, qk_dims,
                                preferred_element_type=jnp.float32)   # (Nq, Nk)
            s = s - jnp.max(s, axis=-1, keepdims=True)
            ex = jnp.exp(s)
            p = ex * pl.reciprocal(jnp.sum(ex, axis=-1, keepdims=True),
                                   approx=False)       # softmax over keys
            heads.append(jnp.dot(p, vh, preferred_element_type=jnp.float32))

        # Recombine heads and do ONE output-projection matmul.
        merged = jnp.concatenate(heads, axis=-1)       # (Nq, internal_dim)
        out = jnp.dot(merged, wo_t, preferred_element_type=jnp.float32) + bo
        out_ref[b] = out.astype(out_ref.dtype)


# ----------------------------------------------------------------------------
# Wrapper
# ----------------------------------------------------------------------------
def attention_pallas(q, k, v, params, num_heads):
    B, Nq, E = q.shape
    _, Nk, _ = k.shape
    wq, bq, wk, bk, wv, bv, wo, bo = params
    internal_dim = wq.shape[0]
    head_dim = internal_dim // num_heads

    # At most two grid steps: the "parallel" batch axis shards across the two
    # TensorCores on v7x, while v5e/v6e (single TC) pay at most one extra
    # ~0.35us grid-step overhead instead of B-1.
    if B >= 2 and B % 2 == 0:
        batch_block = B // 2
    else:
        batch_block = B
    grid = B // batch_block

    kernel = functools.partial(attention_kernel,
                               num_heads=num_heads, head_dim=head_dim,
                               batch_block=batch_block)

    def full_spec(*shape):
        return pl.BlockSpec(shape, lambda b, _n=len(shape): (0,) * _n)

    grid_spec = pltpu.PrefetchScalarGridSpec(
        num_scalar_prefetch=0,
        grid=(grid,),
        in_specs=[
            pl.BlockSpec((batch_block, Nq, E), lambda b: (b, 0, 0)),   # q
            pl.BlockSpec((batch_block, Nk, E), lambda b: (b, 0, 0)),   # k
            pl.BlockSpec((batch_block, Nk, E), lambda b: (b, 0, 0)),   # v
            full_spec(E, internal_dim), full_spec(1, internal_dim),    # Wq.T, bq
            full_spec(E, internal_dim), full_spec(1, internal_dim),    # Wk.T, bk
            full_spec(E, internal_dim), full_spec(1, internal_dim),    # Wv.T, bv
            full_spec(internal_dim, E), full_spec(1, E),               # Wo.T, bo
        ],
        out_specs=pl.BlockSpec((batch_block, Nq, E), lambda b: (b, 0, 0)),
    )

    return pl.pallas_call(
        kernel,
        out_shape=jax.ShapeDtypeStruct((B, Nq, E), q.dtype),
        grid_spec=grid_spec,
        compiler_params=pltpu.CompilerParams(
            dimension_semantics=("parallel",)),
    )(q, k, v,
      wq.T, bq.reshape(1, -1),     # pre-transposed once, outside the kernel
      wk.T, bk.reshape(1, -1),
      wv.T, bv.reshape(1, -1),
      wo.T, bo.reshape(1, -1))


# ----------------------------------------------------------------------------
# Pure-JAX reference (mirrors the PyTorch forward exactly)
# ----------------------------------------------------------------------------
def attention_ref(q, k, v, params, num_heads):
    wq, bq, wk, bk, wv, bv, wo, bo = params
    B, Nq, _ = q.shape
    _, Nk, _ = k.shape
    internal_dim = wq.shape[0]
    d = internal_dim // num_heads

    qp = q @ wq.T + bq
    kp = k @ wk.T + bk
    vp = v @ wv.T + bv

    def sep(x):
        b, t, c = x.shape
        return x.reshape(b, t, num_heads, c // num_heads).transpose(0, 2, 1, 3)

    qh, kh, vh = sep(qp), sep(kp), sep(vp)
    attn = jnp.einsum("bhqd,bhkd->bhqk", qh, kh) / math.sqrt(d)
    attn = jax.nn.softmax(attn, axis=-1)
    out = jnp.einsum("bhqk,bhkd->bhqd", attn, vh)
    out = out.transpose(0, 2, 1, 3).reshape(B, Nq, internal_dim)
    return out @ wo.T + bo


# ----------------------------------------------------------------------------
# Main
# ----------------------------------------------------------------------------
if __name__ == "__main__":
    embedding_dim = 32
    num_heads = 4
    downsample_rate = 1
    internal_dim = embedding_dim // downsample_rate

    B, Nq, Nk = 2, 8, 16

    key = jax.random.PRNGKey(0)
    keys = jax.random.split(key, 11)

    q = jax.random.normal(keys[0], (B, Nq, embedding_dim), jnp.float32)
    k = jax.random.normal(keys[1], (B, Nk, embedding_dim), jnp.float32)
    v = jax.random.normal(keys[2], (B, Nk, embedding_dim), jnp.float32)

    def lin(kw, kb, out_dim, in_dim):
        w = jax.random.normal(kw, (out_dim, in_dim), jnp.float32) * 0.05
        b = jax.random.normal(kb, (out_dim,), jnp.float32) * 0.05
        return w, b

    wq, bq = lin(keys[3], keys[4], internal_dim, embedding_dim)
    wk, bk = lin(keys[5], keys[6], internal_dim, embedding_dim)
    wv, bv = lin(keys[7], keys[8], internal_dim, embedding_dim)
    wo, bo = lin(keys[9], keys[10], embedding_dim, internal_dim)
    params = (wq, bq, wk, bk, wv, bv, wo, bo)

    out = attention_pallas(q, k, v, params, num_heads)
    out = jax.block_until_ready(out)

    ref = attention_ref(q, k, v, params, num_heads)
    assert out.shape == (B, Nq, embedding_dim)
    assert jnp.allclose(out, ref, atol=1e-4, rtol=1e-4), "mismatch vs reference"

    print("KERNEL_OK")
</pallas_src>

<mosaic_0001>
module attributes {stable_mosaic.version = 11 : i64} {
  func.func @attention_kernel(%arg0: i32, %arg1: memref<1x8x32xf32, #tpu.memory_space<vmem>>, %arg2: memref<1x16x32xf32, #tpu.memory_space<vmem>>, %arg3: memref<1x16x32xf32, #tpu.memory_space<vmem>>, %arg4: memref<32x32xf32, #tpu.memory_space<vmem>>, %arg5: memref<1x32xf32, #tpu.memory_space<vmem>>, %arg6: memref<32x32xf32, #tpu.memory_space<vmem>>, %arg7: memref<1x32xf32, #tpu.memory_space<vmem>>, %arg8: memref<32x32xf32, #tpu.memory_space<vmem>>, %arg9: memref<1x32xf32, #tpu.memory_space<vmem>>, %arg10: memref<32x32xf32, #tpu.memory_space<vmem>>, %arg11: memref<1x32xf32, #tpu.memory_space<vmem>>, %arg12: memref<1x8x32xf32, #tpu.memory_space<vmem>>) attributes {dimension_semantics = [#tpu.dimension_semantics<parallel>], iteration_bounds = array<i64: 2>, scalar_prefetch = 0 : i64, scratch_operands = 0 : i64, tpu.core_type = #tpu.core_type<tc>, window_params = [{transform_indices = @transform_0, window_bounds = array<i64: 1, 8, 32>}, {transform_indices = @transform_1, window_bounds = array<i64: 1, 16, 32>}, {transform_indices = @transform_2, window_bounds = array<i64: 1, 16, 32>}, {pipeline_mode = #tpu.pipeline_mode<synchronous>, transform_indices = @transform_3, window_bounds = array<i64: 32, 32>}, {pipeline_mode = #tpu.pipeline_mode<synchronous>, transform_indices = @transform_4, window_bounds = array<i64: 1, 32>}, {pipeline_mode = #tpu.pipeline_mode<synchronous>, transform_indices = @transform_5, window_bounds = array<i64: 32, 32>}, {pipeline_mode = #tpu.pipeline_mode<synchronous>, transform_indices = @transform_6, window_bounds = array<i64: 1, 32>}, {pipeline_mode = #tpu.pipeline_mode<synchronous>, transform_indices = @transform_7, window_bounds = array<i64: 32, 32>}, {pipeline_mode = #tpu.pipeline_mode<synchronous>, transform_indices = @transform_8, window_bounds = array<i64: 1, 32>}, {pipeline_mode = #tpu.pipeline_mode<synchronous>, transform_indices = @transform_9, window_bounds = array<i64: 32, 32>}, {pipeline_mode = #tpu.pipeline_mode<synchronous>, transform_indices = @transform_10, window_bounds = array<i64: 1, 32>}, {transform_indices = @transform_11, window_bounds = array<i64: 1, 8, 32>}]} {
    %c0 = arith.constant 0 : index
    %c0_0 = arith.constant 0 : index
    %0 = vector.load %arg4[%c0, %c0_0] : memref<32x32xf32, #tpu.memory_space<vmem>>, vector<32x32xf32>
    %c0_1 = arith.constant 0 : index
    %c0_2 = arith.constant 0 : index
    %1 = vector.load %arg6[%c0_1, %c0_2] : memref<32x32xf32, #tpu.memory_space<vmem>>, vector<32x32xf32>
    %c0_3 = arith.constant 0 : index
    %c0_4 = arith.constant 0 : index
    %2 = vector.load %arg8[%c0_3, %c0_4] : memref<32x32xf32, #tpu.memory_space<vmem>>, vector<32x32xf32>
    %c0_5 = arith.constant 0 : index
    %c0_6 = arith.constant 0 : index
    %3 = vector.load %arg10[%c0_5, %c0_6] : memref<32x32xf32, #tpu.memory_space<vmem>>, vector<32x32xf32>
    %c0_7 = arith.constant 0 : index
    %c0_8 = arith.constant 0 : index
    %4 = vector.load %arg5[%c0_7, %c0_8] : memref<1x32xf32, #tpu.memory_space<vmem>>, vector<1x32xf32>
    %c0_9 = arith.constant 0 : index
    %c0_10 = arith.constant 0 : index
    %5 = vector.load %arg7[%c0_9, %c0_10] : memref<1x32xf32, #tpu.memory_space<vmem>>, vector<1x32xf32>
    %c0_11 = arith.constant 0 : index
    %c0_12 = arith.constant 0 : index
    %6 = vector.load %arg9[%c0_11, %c0_12] : memref<1x32xf32, #tpu.memory_space<vmem>>, vector<1x32xf32>
    %c0_13 = arith.constant 0 : index
    %c0_14 = arith.constant 0 : index
    %7 = vector.load %arg11[%c0_13, %c0_14] : memref<1x32xf32, #tpu.memory_space<vmem>>, vector<1x32xf32>
    %c0_15 = arith.constant 0 : index
    %c0_16 = arith.constant 0 : index
    %c0_17 = arith.constant 0 : index
    %8 = vector.load %arg1[%c0_15, %c0_16, %c0_17] : memref<1x8x32xf32, #tpu.memory_space<vmem>>, vector<1x8x32xf32>
    %9 = vector.shape_cast %8 : vector<1x8x32xf32> to vector<8x32xf32>
    %c0_18 = arith.constant 0 : index
    %c0_19 = arith.constant 0 : index
    %c0_20 = arith.constant 0 : index
    %10 = vector.load %arg2[%c0_18, %c0_19, %c0_20] : memref<1x16x32xf32, #tpu.memory_space<vmem>>, vector<1x16x32xf32>
    %11 = vector.shape_cast %10 : vector<1x16x32xf32> to vector<16x32xf32>
    %c0_21 = arith.constant 0 : index
    %c0_22 = arith.constant 0 : index
    %c0_23 = arith.constant 0 : index
    %12 = vector.load %arg3[%c0_21, %c0_22, %c0_23] : memref<1x16x32xf32, #tpu.memory_space<vmem>>, vector<1x16x32xf32>
    %13 = vector.shape_cast %12 : vector<1x16x32xf32> to vector<16x32xf32>
    %cst = arith.constant dense<0.000000e+00> : vector<8x32xf32>
    %14 = tpu.matmul %9, %0, %cst {dimension_numbers = #tpu.dot_dimension_numbers<[1], [0], [0], [1], [0, 0, 1, 1], [], []>} : vector<8x32xf32>, vector<32x32xf32>, vector<8x32xf32> -> vector<8x32xf32>
    %15 = vector.broadcast %4 : vector<1x32xf32> to vector<8x32xf32>
    %16 = arith.addf %14, %15 : vector<8x32xf32>
    %cst_24 = arith.constant dense<0.000000e+00> : vector<16x32xf32>
    %17 = tpu.matmul %11, %1, %cst_24 {dimension_numbers = #tpu.dot_dimension_numbers<[1], [0], [0], [1], [0, 0, 1, 1], [], []>} : vector<16x32xf32>, vector<32x32xf32>, vector<16x32xf32> -> vector<16x32xf32>
    %18 = vector.broadcast %5 : vector<1x32xf32> to vector<16x32xf32>
    %19 = arith.addf %17, %18 : vector<16x32xf32>
    %cst_25 = arith.constant dense<0.000000e+00> : vector<16x32xf32>
    %20 = tpu.matmul %13, %2, %cst_25 {dimension_numbers = #tpu.dot_dimension_numbers<[1], [0], [0], [1], [0, 0, 1, 1], [], []>} : vector<16x32xf32>, vector<32x32xf32>, vector<16x32xf32> -> vector<16x32xf32>
    %21 = vector.broadcast %6 : vector<1x32xf32> to vector<16x32xf32>
    %22 = arith.addf %20, %21 : vector<16x32xf32>
    %23 = vector.extract_strided_slice %16 {offsets = [0, 0], sizes = [8, 8], strides = [1, 1]} : vector<8x32xf32> to vector<8x8xf32>
    %cst_26 = arith.constant 0.353553385 : f32
    %24 = vector.broadcast %cst_26 : f32 to vector<8x8xf32>
    %25 = arith.mulf %23, %24 : vector<8x8xf32>
    %26 = vector.extract_strided_slice %19 {offsets = [0, 0], sizes = [16, 8], strides = [1, 1]} : vector<16x32xf32> to vector<16x8xf32>
    %27 = vector.extract_strided_slice %22 {offsets = [0, 0], sizes = [16, 8], strides = [1, 1]} : vector<16x32xf32> to vector<16x8xf32>
    %cst_27 = arith.constant dense<0.000000e+00> : vector<8x16xf32>
    %28 = tpu.matmul %25, %26, %cst_27 {dimension_numbers = #tpu.dot_dimension_numbers<[1], [1], [0], [0], [0, 0, 1, 0], [], []>} : vector<8x8xf32>, vector<16x8xf32>, vector<8x16xf32> -> vector<8x16xf32>
    %cst_28 = arith.constant dense<0xFF800000> : vector<8xf32>
    %29 = vector.multi_reduction <maximumf>, %28, %cst_28 [1] : vector<8x16xf32> to vector<8xf32>
    %30 = vector.shape_cast %29 : vector<8xf32> to vector<8x1xf32>
    %31 = vector.broadcast %30 : vector<8x1xf32> to vector<8x16xf32>
    %32 = arith.subf %28, %31 : vector<8x16xf32>
    %33 = math.exp %32 : vector<8x16xf32>
    %cst_29 = arith.constant dense<0.000000e+00> : vector<8xf32>
    %34 = vector.multi_reduction <add>, %33, %cst_29 [1] : vector<8x16xf32> to vector<8xf32>
    %35 = vector.shape_cast %34 : vector<8xf32> to vector<8x1xf32>
    %36 = tpu.reciprocal %35 : vector<8x1xf32> -> vector<8x1xf32>
    %37 = vector.broadcast %36 : vector<8x1xf32> to vector<8x16xf32>
    %38 = arith.mulf %33, %37 : vector<8x16xf32>
    %cst_30 = arith.constant dense<0.000000e+00> : vector<8x8xf32>
    %39 = tpu.matmul %38, %27, %cst_30 {dimension_numbers = #tpu.dot_dimension_numbers<[1], [0], [0], [1], [0, 0, 1, 1], [], []>} : vector<8x16xf32>, vector<16x8xf32>, vector<8x8xf32> -> vector<8x8xf32>
    %40 = vector.extract_strided_slice %16 {offsets = [0, 8], sizes = [8, 8], strides = [1, 1]} : vector<8x32xf32> to vector<8x8xf32>
    %cst_31 = arith.constant 0.353553385 : f32
    %41 = vector.broadcast %cst_31 : f32 to vector<8x8xf32>
    %42 = arith.mulf %40, %41 : vector<8x8xf32>
    %43 = vector.extract_strided_slice %19 {offsets = [0, 8], sizes = [16, 8], strides = [1, 1]} : vector<16x32xf32> to vector<16x8xf32>
    %44 = vector.extract_strided_slice %22 {offsets = [0, 8], sizes = [16, 8], strides = [1, 1]} : vector<16x32xf32> to vector<16x8xf32>
    %cst_32 = arith.constant dense<0.000000e+00> : vector<8x16xf32>
    %45 = tpu.matmul %42, %43, %cst_32 {dimension_numbers = #tpu.dot_dimension_numbers<[1], [1], [0], [0], [0, 0, 1, 0], [], []>} : vector<8x8xf32>, vector<16x8xf32>, vector<8x16xf32> -> vector<8x16xf32>
    %cst_33 = arith.constant dense<0xFF800000> : vector<8xf32>
    %46 = vector.multi_reduction <maximumf>, %45, %cst_33 [1] : vector<8x16xf32> to vector<8xf32>
    %47 = vector.shape_cast %46 : vector<8xf32> to vector<8x1xf32>
    %48 = vector.broadcast %47 : vector<8x1xf32> to vector<8x16xf32>
    %49 = arith.subf %45, %48 : vector<8x16xf32>
    %50 = math.exp %49 : vector<8x16xf32>
    %cst_34 = arith.constant dense<0.000000e+00> : vector<8xf32>
    %51 = vector.multi_reduction <add>, %50, %cst_34 [1] : vector<8x16xf32> to vector<8xf32>
    %52 = vector.shape_cast %51 : vector<8xf32> to vector<8x1xf32>
    %53 = tpu.reciprocal %52 : vector<8x1xf32> -> vector<8x1xf32>
    %54 = vector.broadcast %53 : vector<8x1xf32> to vector<8x16xf32>
    %55 = arith.mulf %50, %54 : vector<8x16xf32>
    %cst_35 = arith.constant dense<0.000000e+00> : vector<8x8xf32>
    %56 = tpu.matmul %55, %44, %cst_35 {dimension_numbers = #tpu.dot_dimension_numbers<[1], [0], [0], [1], [0, 0, 1, 1], [], []>} : vector<8x16xf32>, vector<16x8xf32>, vector<8x8xf32> -> vector<8x8xf32>
    %57 = vector.extract_strided_slice %16 {offsets = [0, 16], sizes = [8, 8], strides = [1, 1]} : vector<8x32xf32> to vector<8x8xf32>
    %cst_36 = arith.constant 0.353553385 : f32
    %58 = vector.broadcast %cst_36 : f32 to vector<8x8xf32>
    %59 = arith.mulf %57, %58 : vector<8x8xf32>
    %60 = vector.extract_strided_slice %19 {offsets = [0, 16], sizes = [16, 8], strides = [1, 1]} : vector<16x32xf32> to vector<16x8xf32>
    %61 = vector.extract_strided_slice %22 {offsets = [0, 16], sizes = [16, 8], strides = [1, 1]} : vector<16x32xf32> to vector<16x8xf32>
    %cst_37 = arith.constant dense<0.000000e+00> : vector<8x16xf32>
    %62 = tpu.matmul %59, %60, %cst_37 {dimension_numbers = #tpu.dot_dimension_numbers<[1], [1], [0], [0], [0, 0, 1, 0], [], []>} : vector<8x8xf32>, vector<16x8xf32>, vector<8x16xf32> -> vector<8x16xf32>
    %cst_38 = arith.constant dense<0xFF800000> : vector<8xf32>
    %63 = vector.multi_reduction <maximumf>, %62, %cst_38 [1] : vector<8x16xf32> to vector<8xf32>
    %64 = vector.shape_cast %63 : vector<8xf32> to vector<8x1xf32>
    %65 = vector.broadcast %64 : vector<8x1xf32> to vector<8x16xf32>
    %66 = arith.subf %62, %65 : vector<8x16xf32>
    %67 = math.exp %66 : vector<8x16xf32>
    %cst_39 = arith.constant dense<0.000000e+00> : vector<8xf32>
    %68 = vector.multi_reduction <add>, %67, %cst_39 [1] : vector<8x16xf32> to vector<8xf32>
    %69 = vector.shape_cast %68 : vector<8xf32> to vector<8x1xf32>
    %70 = tpu.reciprocal %69 : vector<8x1xf32> -> vector<8x1xf32>
    %71 = vector.broadcast %70 : vector<8x1xf32> to vector<8x16xf32>
    %72 = arith.mulf %67, %71 : vector<8x16xf32>
    %cst_40 = arith.constant dense<0.000000e+00> : vector<8x8xf32>
    %73 = tpu.matmul %72, %61, %cst_40 {dimension_numbers = #tpu.dot_dimension_numbers<[1], [0], [0], [1], [0, 0, 1, 1], [], []>} : vector<8x16xf32>, vector<16x8xf32>, vector<8x8xf32> -> vector<8x8xf32>
    %74 = vector.extract_strided_slice %16 {offsets = [0, 24], sizes = [8, 8], strides = [1, 1]} : vector<8x32xf32> to vector<8x8xf32>
    %cst_41 = arith.constant 0.353553385 : f32
    %75 = vector.broadcast %cst_41 : f32 to vector<8x8xf32>
    %76 = arith.mulf %74, %75 : vector<8x8xf32>
    %77 = vector.extract_strided_slice %19 {offsets = [0, 24], sizes = [16, 8], strides = [1, 1]} : vector<16x32xf32> to vector<16x8xf32>
    %78 = vector.extract_strided_slice %22 {offsets = [0, 24], sizes = [16, 8], strides = [1, 1]} : vector<16x32xf32> to vector<16x8xf32>
    %cst_42 = arith.constant dense<0.000000e+00> : vector<8x16xf32>
    %79 = tpu.matmul %76, %77, %cst_42 {dimension_numbers = #tpu.dot_dimension_numbers<[1], [1], [0], [0], [0, 0, 1, 0], [], []>} : vector<8x8xf32>, vector<16x8xf32>, vector<8x16xf32> -> vector<8x16xf32>
    %cst_43 = arith.constant dense<0xFF800000> : vector<8xf32>
    %80 = vector.multi_reduction <maximumf>, %79, %cst_43 [1] : vector<8x16xf32> to vector<8xf32>
    %81 = vector.shape_cast %80 : vector<8xf32> to vector<8x1xf32>
    %82 = vector.broadcast %81 : vector<8x1xf32> to vector<8x16xf32>
    %83 = arith.subf %79, %82 : vector<8x16xf32>
    %84 = math.exp %83 : vector<8x16xf32>
    %cst_44 = arith.constant dense<0.000000e+00> : vector<8xf32>
    %85 = vector.multi_reduction <add>, %84, %cst_44 [1] : vector<8x16xf32> to vector<8xf32>
    %86 = vector.shape_cast %85 : vector<8xf32> to vector<8x1xf32>
    %87 = tpu.reciprocal %86 : vector<8x1xf32> -> vector<8x1xf32>
    %88 = vector.broadcast %87 : vector<8x1xf32> to vector<8x16xf32>
    %89 = arith.mulf %84, %88 : vector<8x16xf32>
    %cst_45 = arith.constant dense<0.000000e+00> : vector<8x8xf32>
    %90 = tpu.matmul %89, %78, %cst_45 {dimension_numbers = #tpu.dot_dimension_numbers<[1], [0], [0], [1], [0, 0, 1, 1], [], []>} : vector<8x16xf32>, vector<16x8xf32>, vector<8x8xf32> -> vector<8x8xf32>
    %91 = tpu.concatenate %39, %56, %73, %90 in 1 : vector<8x8xf32>, vector<8x8xf32>, vector<8x8xf32>, vector<8x8xf32> -> vector<8x32xf32>
    %cst_46 = arith.constant dense<0.000000e+00> : vector<8x32xf32>
    %92 = tpu.matmul %91, %3, %cst_46 {dimension_numbers = #tpu.dot_dimension_numbers<[1], [0], [0], [1], [0, 0, 1, 1], [], []>} : vector<8x32xf32>, vector<32x32xf32>, vector<8x32xf32> -> vector<8x32xf32>
    %93 = vector.broadcast %7 : vector<1x32xf32> to vector<8x32xf32>
    %94 = arith.addf %92, %93 : vector<8x32xf32>
    %c0_47 = arith.constant 0 : index
    %c0_48 = arith.constant 0 : index
    %c0_49 = arith.constant 0 : index
    %95 = vector.load %arg12[%c0_47, %c0_48, %c0_49] : memref<1x8x32xf32, #tpu.memory_space<vmem>>, vector<1x8x32xf32>
    %96 = vector.shape_cast %95 : vector<1x8x32xf32> to vector<8x32xf32>
    %97 = vector.shape_cast %94 : vector<8x32xf32> to vector<1x8x32xf32>
    tpu.vector_store %arg12[%c0_47, %c0_48, %c0_49], %97 {strides = array<i32>} : memref<1x8x32xf32, #tpu.memory_space<vmem>>, vector<1x8x32xf32>,
    return
  }
  func.func @transform_0(%arg0: i32) -> (i32, i32, i32) {
    %c0_i32 = arith.constant 0 : i32
    %c0_i32_0 = arith.constant 0 : i32
    %c0_i32_1 = arith.constant 0 : i32
    return %arg0, %c0_i32, %c0_i32_0 : i32, i32, i32
  }
  func.func @transform_1(%arg0: i32) -> (i32, i32, i32) {
    %c0_i32 = arith.constant 0 : i32
    %c0_i32_0 = arith.constant 0 : i32
    %c0_i32_1 = arith.constant 0 : i32
    return %arg0, %c0_i32, %c0_i32_0 : i32, i32, i32
  }
  func.func @transform_2(%arg0: i32) -> (i32, i32, i32) {
    %c0_i32 = arith.constant 0 : i32
    %c0_i32_0 = arith.constant 0 : i32
    %c0_i32_1 = arith.constant 0 : i32
    return %arg0, %c0_i32, %c0_i32_0 : i32, i32, i32
  }
  func.func @transform_3(%arg0: i32) -> (i32, i32) {
    %c0_i32 = arith.constant 0 : i32
    %c0_i32_0 = arith.constant 0 : i32
    %c0_i32_1 = arith.constant 0 : i32
    return %c0_i32, %c0_i32_0 : i32, i32
  }
  func.func @transform_4(%arg0: i32) -> (i32, i32) {
    %c0_i32 = arith.constant 0 : i32
    %c0_i32_0 = arith.constant 0 : i32
    %c0_i32_1 = arith.constant 0 : i32
    return %c0_i32, %c0_i32_0 : i32, i32
  }
  func.func @transform_5(%arg0: i32) -> (i32, i32) {
    %c0_i32 = arith.constant 0 : i32
    %c0_i32_0 = arith.constant 0 : i32
    %c0_i32_1 = arith.constant 0 : i32
    return %c0_i32, %c0_i32_0 : i32, i32
  }
  func.func @transform_6(%arg0: i32) -> (i32, i32) {
    %c0_i32 = arith.constant 0 : i32
    %c0_i32_0 = arith.constant 0 : i32
    %c0_i32_1 = arith.constant 0 : i32
    return %c0_i32, %c0_i32_0 : i32, i32
  }
  func.func @transform_7(%arg0: i32) -> (i32, i32) {
    %c0_i32 = arith.constant 0 : i32
    %c0_i32_0 = arith.constant 0 : i32
    %c0_i32_1 = arith.constant 0 : i32
    return %c0_i32, %c0_i32_0 : i32, i32
  }
  func.func @transform_8(%arg0: i32) -> (i32, i32) {
    %c0_i32 = arith.constant 0 : i32
    %c0_i32_0 = arith.constant 0 : i32
    %c0_i32_1 = arith.constant 0 : i32
    return %c0_i32, %c0_i32_0 : i32, i32
  }
  func.func @transform_9(%arg0: i32) -> (i32, i32) {
    %c0_i32 = arith.constant 0 : i32
    %c0_i32_0 = arith.constant 0 : i32
    %c0_i32_1 = arith.constant 0 : i32
    return %c0_i32, %c0_i32_0 : i32, i32
  }
  func.func @transform_10(%arg0: i32) -> (i32, i32) {
    %c0_i32 = arith.constant 0 : i32
    %c0_i32_0 = arith.constant 0 : i32
    %c0_i32_1 = arith.constant 0 : i32
    return %c0_i32, %c0_i32_0 : i32, i32
  }
  func.func @transform_11(%arg0: i32) -> (i32, i32, i32) {
    %c0_i32 = arith.constant 0 : i32
    %c0_i32_0 = arith.constant 0 : i32
    %c0_i32_1 = arith.constant 0 : i32
    return %arg0, %c0_i32, %c0_i32_0 : i32, i32, i32
  }
}

</mosaic_0001>

<llo_original>
// kernel: tpu_custom_call.1
$region0: #{tpu_custom_call.1}
  #allocation0 [shape = 'u32[]', space=smem, size = 0x4, offset = 0x4, fixed_abs, tag = 'smem constant byte address 0x4 - core index']
  #allocation1 [shape = 'u32[72,128]{1,0:T(1,128)}', space=vmem, size = 0x9000, scoped, tag = 'internal scratch']
  %s0 = inlined_call_operand.hbm [shape: f32[2,8,32], index: 0, kind: input, shape index: {}]
  %s1 = inlined_call_operand.hbm [shape: f32[2,16,32], index: 1, kind: input, shape index: {}]
  %s2 = inlined_call_operand.hbm [shape: f32[2,16,32], index: 2, kind: input, shape index: {}]
  %s3 = inlined_call_operand.hbm [shape: f32[32,32], index: 3, kind: input, shape index: {}]
  %s4 = inlined_call_operand.vmem [shape: f32[1,32], index: 4, kind: input, shape index: {}]
  %s5 = inlined_call_operand.hbm [shape: f32[32,32], index: 5, kind: input, shape index: {}]
  %s6 = inlined_call_operand.vmem [shape: f32[1,32], index: 6, kind: input, shape index: {}]
  %s7 = inlined_call_operand.hbm [shape: f32[32,32], index: 7, kind: input, shape index: {}]
  %s8 = inlined_call_operand.vmem [shape: f32[1,32], index: 8, kind: input, shape index: {}]
  %s9 = inlined_call_operand.hbm [shape: f32[32,32], index: 9, kind: input, shape index: {}]
  %s10 = inlined_call_operand.vmem [shape: f32[1,32], index: 10, kind: input, shape index: {}]
  %s11 = inlined_call_operand.hbm [shape: f32[2,8,32], index: 11, kind: output, shape index: {}]
  %s12 = sld [smem:[#allocation0]]
  $region105: #{tpu_custom_call.1} parent=0
    _
  %s14 = ssub.s32 1, %s12
  %s15 = scalar_select 0, %s14, %s12
  $region1: #{tpu_custom_call.1} parent=0
    #allocation2 [shape = 'u8[8192]{0}', space=vmem, size = 0x2000, scoped, tag = 'input window, operand 0']
    #allocation3 [shape = 's32[2]{0}', space=sflag, size = 0x8, scoped, tag = 'scoped memory for tpu_custom_call.1']
    #allocation4 [shape = 's32[2]{0}', space=sflag, size = 0x8, scoped, tag = 'scoped memory for tpu_custom_call.1']
    #allocation5 [shape = 'u8[16384]{0}', space=vmem, size = 0x4000, scoped, tag = 'input window, operand 1']
    #allocation6 [shape = 's32[2]{0}', space=sflag, size = 0x8, scoped, tag = 'scoped memory for tpu_custom_call.1']
    #allocation7 [shape = 'u8[16384]{0}', space=vmem, size = 0x4000, scoped, tag = 'input window, operand 2']
    #allocation8 [shape = 'u8[16384]{0}', space=vmem, size = 0x4000, scoped, tag = 'input window, operand 3, single buffered']
    #allocation9 [shape = 's32[1]{0}', space=sflag, size = 0x4, scoped, tag = 'scoped memory for tpu_custom_call.1']
    #allocation10 [shape = 'u8[16384]{0}', space=vmem, size = 0x4000, scoped, tag = 'input window, operand 5, single buffered']
    #allocation11 [shape = 'u8[16384]{0}', space=vmem, size = 0x4000, scoped, tag = 'input window, operand 7, single buffered']
    #allocation12 [shape = 's32[1]{0}', space=sflag, size = 0x4, scoped, tag = 'scoped memory for tpu_custom_call.1']
    #allocation13 [shape = 'u8[16384]{0}', space=vmem, size = 0x4000, scoped, tag = 'input window, operand 9, single buffered']
    #allocation14 [shape = 'u8[8192]{0}', space=vmem, size = 0x2000, scoped, tag = 'output window, operand 0']
    %16 = vsyncpa [#allocation3], 0
    %s17 = scalar_lea.sflag [#allocation3], 1
    %18 = vsyncpa %s17, 0
    %19 = vsyncpa [#allocation6], 0
    %s20 = scalar_lea.sflag [#allocation6], 1
    %21 = vsyncpa %s20, 0
    %22 = vsyncpa [#allocation9], 0
    %23 = vsyncpa [#allocation12], 0
    %24 = vsyncpa [#allocation4], 0
    %s25 = scalar_lea.sflag [#allocation4], 1
    %26 = vsyncpa %s25, 0
    loop: start=0, step=1, limit=4
    $region2: #{tpu_custom_call.1} parent=1 // loop_pre_header
      _
    $region3: #{tpu_custom_call.1} parent=1 // loop_header
      %s28 = sphi 0, %s32
      %p29 = scmp.ge.s32.totalorder %s28, 4
      %s38 = sphi 0, %s40
      %s41 = sphi 0, %s38
      %s42 = sphi 0, %s41
      %s58 = sphi 0, %s42
      %s64 = sphi 0, %s66
      %s67 = sphi 0, %s64
      %s68 = sphi 0, %s67
      %s84 = sphi 0, %s68
      %s90 = sphi 0, %s92
      %s93 = sphi 0, %s90
      %s94 = sphi 0, %s93
      %s110 = sphi 0, %s94
      %s114 = sphi 0, %s114
      %s116 = sphi 0, %s114
      %s117 = sphi 0, %s116
      %s131 = sphi 0, %s117
      %s135 = sphi 0, %s135
      %s137 = sphi 0, %s135
      %s138 = sphi 0, %s137
      %s152 = sphi 0, %s138
      %s156 = sphi 0, %s156
      %s158 = sphi 0, %s156
      %s159 = sphi 0, %s158
      %s173 = sphi 0, %s159
      %s177 = sphi 0, %s177
      %s179 = sphi 0, %s177
      %s180 = sphi 0, %s179
      %s194 = sphi 0, %s180
      %s198 = sphi 0, %s198
      %s200 = sphi 0, %s198
      %s201 = sphi 0, %s200
      %s215 = sphi 0, %s201
      %s219 = sphi 0, %s219
      %s221 = sphi 0, %s219
      %s222 = sphi 0, %s221
      %s236 = sphi 0, %s222
      %s240 = sphi 0, %s240
      %s242 = sphi 0, %s240
      %s243 = sphi 0, %s242
      %s257 = sphi 0, %s243
      %s261 = sphi 0, %s261
      %s263 = sphi 0, %s261
      %s264 = sphi 0, %s263
      %s278 = sphi 0, %s264
      %s284 = sphi 0, %s286
      %s287 = sphi 0, %s284
      %s288 = sphi 0, %s287
      %s304 = sphi 0, %s288
    $region4: #{tpu_custom_call.1} parent=1 // loop_header_branch
      %31 = sbr.rel (%p29) target = $region8
    $region5: #{tpu_custom_call.1} parent=1 // loop_body
      %s33 = ssub.s32 %s28, 1
      %s34 = ssub.s32 %s28, 2
      %s35 = sadd.s32 %s28, 1
      %s36 = ssub.s32 %s28, %s35
      %p37 = scmp.eq.s32.totalorder %s36, 0
      %s39 = sadd.s32 %s38, 1
      %s40 = scalar_select %p37, %s38, %s39
      %p43 = pneg %p37
      %p44 = scmp.eq.s32.totalorder %s28, 1
      %p45 = por %p43, %p44
      %p46 = scmp.ne.s32.totalorder %s38, %s41
      %p47 = scmp.eq.s32.totalorder %s28, 0
      %p48 = por %p46, %p47
      %p49 = scmp.ne.s32.totalorder %s38, %s41
      %p50 = scmp.eq.s32.totalorder %s33, 1
      %p51 = por %p49, %p50
      %p52 = scmp.ne.s32.totalorder %s41, %s42
      %p53 = scmp.eq.s32.totalorder %s33, 0
      %p54 = por %p52, %p53
      %p55 = scmp.ne.s32.totalorder %s41, %s42
      %p56 = scmp.eq.s32.totalorder %s34, 1
      %p57 = por %p55, %p56
      %p59 = scmp.ne.s32.totalorder %s42, %s58
      %p60 = scmp.eq.s32.totalorder %s34, 0
      %p61 = por %p59, %p60
      %s62 = ssub.s32 %s28, %s35
      %p63 = scmp.eq.s32.totalorder %s62, 0
      %s65 = sadd.s32 %s64, 1
      %s66 = scalar_select %p63, %s64, %s65
      %p69 = pneg %p63
      %p70 = scmp.eq.s32.totalorder %s28, 1
      %p71 = por %p69, %p70
      %p72 = scmp.ne.s32.totalorder %s64, %s67
      %p73 = scmp.eq.s32.totalorder %s28, 0
      %p74 = por %p72, %p73
      %p75 = scmp.ne.s32.totalorder %s64, %s67
      %p76 = scmp.eq.s32.totalorder %s33, 1
      %p77 = por %p75, %p76
      %p78 = scmp.ne.s32.totalorder %s67, %s68
      %p79 = scmp.eq.s32.totalorder %s33, 0
      %p80 = por %p78, %p79
      %p81 = scmp.ne.s32.totalorder %s67, %s68
      %p82 = scmp.eq.s32.totalorder %s34, 1
      %p83 = por %p81, %p82
      %p85 = scmp.ne.s32.totalorder %s68, %s84
      %p86 = scmp.eq.s32.totalorder %s34, 0
      %p87 = por %p85, %p86
      %s88 = ssub.s32 %s28, %s35
      %p89 = scmp.eq.s32.totalorder %s88, 0
      %s91 = sadd.s32 %s90, 1
      %s92 = scalar_select %p89, %s90, %s91
      %p95 = pneg %p89
      %p96 = scmp.eq.s32.totalorder %s28, 1
      %p97 = por %p95, %p96
      %p98 = scmp.ne.s32.totalorder %s90, %s93
      %p99 = scmp.eq.s32.totalorder %s28, 0
      %p100 = por %p98, %p99
      %p101 = scmp.ne.s32.totalorder %s90, %s93
      %p102 = scmp.eq.s32.totalorder %s33, 1
      %p103 = por %p101, %p102
      %p104 = scmp.ne.s32.totalorder %s93, %s94
      %p105 = scmp.eq.s32.totalorder %s33, 0
      %p106 = por %p104, %p105
      %p107 = scmp.ne.s32.totalorder %s93, %s94
      %p108 = scmp.eq.s32.totalorder %s34, 1
      %p109 = por %p107, %p108
      %p111 = scmp.ne.s32.totalorder %s94, %s110
      %p112 = scmp.eq.s32.totalorder %s34, 0
      %p113 = por %p111, %p112
      %s115 = sadd.s32 %s114, 1
      %p118 = scmp.eq.s32.totalorder %s28, 1
      %p119 = scmp.ne.s32.totalorder %s114, %s116
      %p120 = scmp.eq.s32.totalorder %s28, 0
      %p121 = por %p119, %p120
      %p122 = scmp.ne.s32.totalorder %s114, %s116
      %p123 = scmp.eq.s32.totalorder %s33, 1
      %p124 = por %p122, %p123
      %p125 = scmp.ne.s32.totalorder %s116, %s117
      %p126 = scmp.eq.s32.totalorder %s33, 0
      %p127 = por %p125, %p126
      %p128 = scmp.ne.s32.totalorder %s116, %s117
      %p129 = scmp.eq.s32.totalorder %s34, 1
      %p130 = por %p128, %p129
      %p132 = scmp.ne.s32.totalorder %s117, %s131
      %p133 = scmp.eq.s32.totalorder %s34, 0
      %p134 = por %p132, %p133
      %s136 = sadd.s32 %s135, 1
      %p139 = scmp.eq.s32.totalorder %s28, 1
      %p140 = scmp.ne.s32.totalorder %s135, %s137
      %p141 = scmp.eq.s32.totalorder %s28, 0
      %p142 = por %p140, %p141
      %p143 = scmp.ne.s32.totalorder %s135, %s137
      %p144 = scmp.eq.s32.totalorder %s33, 1
      %p145 = por %p143, %p144
      %p146 = scmp.ne.s32.totalorder %s137, %s138
      %p147 = scmp.eq.s32.totalorder %s33, 0
      %p148 = por %p146, %p147
      %p149 = scmp.ne.s32.totalorder %s137, %s138
      %p150 = scmp.eq.s32.totalorder %s34, 1
      %p151 = por %p149, %p150
      %p153 = scmp.ne.s32.totalorder %s138, %s152
      %p154 = scmp.eq.s32.totalorder %s34, 0
      %p155 = por %p153, %p154
      %s157 = sadd.s32 %s156, 1
      %p160 = scmp.eq.s32.totalorder %s28, 1
      %p161 = scmp.ne.s32.totalorder %s156, %s158
      %p162 = scmp.eq.s32.totalorder %s28, 0
      %p163 = por %p161, %p162
      %p164 = scmp.ne.s32.totalorder %s156, %s158
      %p165 = scmp.eq.s32.totalorder %s33, 1
      %p166 = por %p164, %p165
      %p167 = scmp.ne.s32.totalorder %s158, %s159
      %p168 = scmp.eq.s32.totalorder %s33, 0
      %p169 = por %p167, %p168
      %p170 = scmp.ne.s32.totalorder %s158, %s159
      %p171 = scmp.eq.s32.totalorder %s34, 1
      %p172 = por %p170, %p171
      %p174 = scmp.ne.s32.totalorder %s159, %s173
      %p175 = scmp.eq.s32.totalorder %s34, 0
      %p176 = por %p174, %p175
      %s178 = sadd.s32 %s177, 1
      %p181 = scmp.eq.s32.totalorder %s28, 1
      %p182 = scmp.ne.s32.totalorder %s177, %s179
      %p183 = scmp.eq.s32.totalorder %s28, 0
      %p184 = por %p182, %p183
      %p185 = scmp.ne.s32.totalorder %s177, %s179
      %p186 = scmp.eq.s32.totalorder %s33, 1
      %p187 = por %p185, %p186
      %p188 = scmp.ne.s32.totalorder %s179, %s180
      %p189 = scmp.eq.s32.totalorder %s33, 0
      %p190 = por %p188, %p189
      %p191 = scmp.ne.s32.totalorder %s179, %s180
      %p192 = scmp.eq.s32.totalorder %s34, 1
      %p193 = por %p191, %p192
      %p195 = scmp.ne.s32.totalorder %s180, %s194
      %p196 = scmp.eq.s32.totalorder %s34, 0
      %p197 = por %p195, %p196
      %s199 = sadd.s32 %s198, 1
      %p202 = scmp.eq.s32.totalorder %s28, 1
      %p203 = scmp.ne.s32.totalorder %s198, %s200
      %p204 = scmp.eq.s32.totalorder %s28, 0
      %p205 = por %p203, %p204
      %p206 = scmp.ne.s32.totalorder %s198, %s200
      %p207 = scmp.eq.s32.totalorder %s33, 1
      %p208 = por %p206, %p207
      %p209 = scmp.ne.s32.totalorder %s200, %s201
      %p210 = scmp.eq.s32.totalorder %s33, 0
      %p211 = por %p209, %p210
      %p212 = scmp.ne.s32.totalorder %s200, %s201
      %p213 = scmp.eq.s32.totalorder %s34, 1
      %p214 = por %p212, %p213
      %p216 = scmp.ne.s32.totalorder %s201, %s215
      %p217 = scmp.eq.s32.totalorder %s34, 0
      %p218 = por %p216, %p217
      %s220 = sadd.s32 %s219, 1
      %p223 = scmp.eq.s32.totalorder %s28, 1
      %p224 = scmp.ne.s32.totalorder %s219, %s221
      %p225 = scmp.eq.s32.totalorder %s28, 0
      %p226 = por %p224, %p225
      %p227 = scmp.ne.s32.totalorder %s219, %s221
      %p228 = scmp.eq.s32.totalorder %s33, 1
      %p229 = por %p227, %p228
      %p230 = scmp.ne.s32.totalorder %s221, %s222
      %p231 = scmp.eq.s32.totalorder %s33, 0
      %p232 = por %p230, %p231
      %p233 = scmp.ne.s32.totalorder %s221, %s222
      %p234 = scmp.eq.s32.totalorder %s34, 1
      %p235 = por %p233, %p234
      %p237 = scmp.ne.s32.totalorder %s222, %s236
      %p238 = scmp.eq.s32.totalorder %s34, 0
      %p239 = por %p237, %p238
      %s241 = sadd.s32 %s240, 1
      %p244 = scmp.eq.s32.totalorder %s28, 1
      %p245 = scmp.ne.s32.totalorder %s240, %s242
      %p246 = scmp.eq.s32.totalorder %s28, 0
      %p247 = por %p245, %p246
      %p248 = scmp.ne.s32.totalorder %s240, %s242
      %p249 = scmp.eq.s32.totalorder %s33, 1
      %p250 = por %p248, %p249
      %p251 = scmp.ne.s32.totalorder %s242, %s243
      %p252 = scmp.eq.s32.totalorder %s33, 0
      %p253 = por %p251, %p252
      %p254 = scmp.ne.s32.totalorder %s242, %s243
      %p255 = scmp.eq.s32.totalorder %s34, 1
      %p256 = por %p254, %p255
      %p258 = scmp.ne.s32.totalorder %s243, %s257
      %p259 = scmp.eq.s32.totalorder %s34, 0
      %p260 = por %p258, %p259
      %s262 = sadd.s32 %s261, 1
      %p265 = scmp.eq.s32.totalorder %s28, 1
      %p266 = scmp.ne.s32.totalorder %s261, %s263
      %p267 = scmp.eq.s32.totalorder %s28, 0
      %p268 = por %p266, %p267
      %p269 = scmp.ne.s32.totalorder %s261, %s263
      %p270 = scmp.eq.s32.totalorder %s33, 1
      %p271 = por %p269, %p270
      %p272 = scmp.ne.s32.totalorder %s263, %s264
      %p273 = scmp.eq.s32.totalorder %s33, 0
      %p274 = por %p272, %p273
      %p275 = scmp.ne.s32.totalorder %s263, %s264
      %p276 = scmp.eq.s32.totalorder %s34, 1
      %p277 = por %p275, %p276
      %p279 = scmp.ne.s32.totalorder %s264, %s278
      %p280 = scmp.eq.s32.totalorder %s34, 0
      %p281 = por %p279, %p280
      %s282 = ssub.s32 %s28, %s35
      %p283 = scmp.eq.s32.totalorder %s282, 0
      %s285 = sadd.s32 %s284, 1
      %s286 = scalar_select %p283, %s284, %s285
      %p289 = pneg %p283
      %p290 = scmp.eq.s32.totalorder %s28, 1
      %p291 = por %p289, %p290
      %p292 = scmp.ne.s32.totalorder %s284, %s287
      %p293 = scmp.eq.s32.totalorder %s28, 0
      %p294 = por %p292, %p293
      %p295 = scmp.ne.s32.totalorder %s284, %s287
      %p296 = scmp.eq.s32.totalorder %s33, 1
      %p297 = por %p295, %p296
      %p298 = scmp.ne.s32.totalorder %s287, %s288
      %p299 = scmp.eq.s32.totalorder %s33, 0
      %p300 = por %p298, %p299
      %p301 = scmp.ne.s32.totalorder %s287, %s288
      %p302 = scmp.eq.s32.totalorder %s34, 1
      %p303 = por %p301, %p302
      %p305 = scmp.ne.s32.totalorder %s288, %s304
      %p306 = scmp.eq.s32.totalorder %s34, 0
      %p307 = por %p305, %p306
      %p308 = scmp.le.s32.totalorder 1, %s28
      %p309 = scmp.lt.s32.totalorder %s28, 3
      %p310 = pnand %p308, %p309
      %p311 = pneg %p310
      // Predicated region
      $region9: #{tpu_custom_call.1} parent=5 // pred_check
        _
      $region10: #{tpu_custom_call.1} parent=5 // pred_check_branch
        %313 = sbr.rel (%p310) target = $region12
      $region11: #{tpu_custom_call.1} parent=5 // pred_region
        %s314 = ssub.s32 %s28, 1
        // Predicated region
        $region13: #{tpu_custom_call.1} parent=11 // pred_check
          %p315 = pneg %p127
        $region14: #{tpu_custom_call.1} parent=11 // pred_check_branch
          %317 = sbr.rel (%p315) target = $region16
        $region15: #{tpu_custom_call.1} parent=11 // pred_region
          %319 = vsyncadd [#allocation9], 0
          %s320 = sshll.u32 %s3, 4
          %s321 = int_to_ptr.hbm [resolvable:$true] %s320
          %s322 = sshll.u32 [#allocation8], 4
          %s323 = int_to_ptr.vmem [resolvable:$true] %s322
          %328 = dma.hbm_to_vmem [thread:$0]  %s321, 512, %s323, [#allocation9], 128, 128, 8
        $region16: #{tpu_custom_call.1} parent=11 // pred_fallthru
          _
        // Predicated region
        $region17: #{tpu_custom_call.1} parent=11 // pred_check
          %p329 = pneg %p148
        $region18: #{tpu_custom_call.1} parent=11 // pred_check_branch
          %331 = sbr.rel (%p329) target = $region20
        $region19: #{tpu_custom_call.1} parent=11 // pred_region
          _
        $region20: #{tpu_custom_call.1} parent=11 // pred_fallthru
          _
        // Predicated region
        $region21: #{tpu_custom_call.1} parent=11 // pred_check
          %p332 = pneg %p169
        $region22: #{tpu_custom_call.1} parent=11 // pred_check_branch
          %334 = sbr.rel (%p332) target = $region24
        $region23: #{tpu_custom_call.1} parent=11 // pred_region
          %336 = vsyncadd [#allocation9], 0
          %s337 = sshll.u32 %s5, 4
          %s338 = int_to_ptr.hbm [resolvable:$true] %s337
          %s339 = sshll.u32 [#allocation10], 4
          %s340 = int_to_ptr.vmem [resolvable:$true] %s339
          %345 = dma.hbm_to_vmem [thread:$0]  %s338, 512, %s340, [#allocation9], 128, 128, 8
        $region24: #{tpu_custom_call.1} parent=11 // pred_fallthru
          _
        // Predicated region
        $region25: #{tpu_custom_call.1} parent=11 // pred_check
          %p346 = pneg %p190
        $region26: #{tpu_custom_call.1} parent=11 // pred_check_branch
          %348 = sbr.rel (%p346) target = $region28
        $region27: #{tpu_custom_call.1} parent=11 // pred_region
          _
        $region28: #{tpu_custom_call.1} parent=11 // pred_fallthru
          _
        // Predicated region
        $region29: #{tpu_custom_call.1} parent=11 // pred_check
          %p349 = pneg %p211
        $region30: #{tpu_custom_call.1} parent=11 // pred_check_branch
          %351 = sbr.rel (%p349) target = $region32
        $region31: #{tpu_custom_call.1} parent=11 // pred_region
          %353 = vsyncadd [#allocation12], 0
          %s354 = sshll.u32 %s7, 4
          %s355 = int_to_ptr.hbm [resolvable:$true] %s354
          %s356 = sshll.u32 [#allocation11], 4
          %s357 = int_to_ptr.vmem [resolvable:$true] %s356
          %362 = dma.hbm_to_vmem [thread:$0]  %s355, 512, %s357, [#allocation12], 128, 128, 8
        $region32: #{tpu_custom_call.1} parent=11 // pred_fallthru
          _
        // Predicated region
        $region33: #{tpu_custom_call.1} parent=11 // pred_check
          %p363 = pneg %p232
        $region34: #{tpu_custom_call.1} parent=11 // pred_check_branch
          %365 = sbr.rel (%p363) target = $region36
        $region35: #{tpu_custom_call.1} parent=11 // pred_region
          _
        $region36: #{tpu_custom_call.1} parent=11 // pred_fallthru
          _
        // Predicated region
        $region37: #{tpu_custom_call.1} parent=11 // pred_check
          %p366 = pneg %p253
        $region38: #{tpu_custom_call.1} parent=11 // pred_check_branch
          %368 = sbr.rel (%p366) target = $region40
        $region39: #{tpu_custom_call.1} parent=11 // pred_region
          %370 = vsyncadd [#allocation12], 0
          %s371 = sshll.u32 %s9, 4
          %s372 = int_to_ptr.hbm [resolvable:$true] %s371
          %s373 = sshll.u32 [#allocation13], 4
          %s374 = int_to_ptr.vmem [resolvable:$true] %s373
          %379 = dma.hbm_to_vmem [thread:$0]  %s372, 512, %s374, [#allocation12], 128, 128, 8
        $region40: #{tpu_custom_call.1} parent=11 // pred_fallthru
          _
        // Predicated region
        $region41: #{tpu_custom_call.1} parent=11 // pred_check
          %p380 = pneg %p274
        $region42: #{tpu_custom_call.1} parent=11 // pred_check_branch
          %382 = sbr.rel (%p380) target = $region44
        $region43: #{tpu_custom_call.1} parent=11 // pred_region
          _
        $region44: #{tpu_custom_call.1} parent=11 // pred_fallthru
          _
      $region12: #{tpu_custom_call.1} parent=5 // pred_fallthru
        _
      %p383 = scmp.lt.s32.totalorder %s28, 2
      // Predicated region
      $region45: #{tpu_custom_call.1} parent=5 // pred_check
        %p384 = pneg %p383
      $region46: #{tpu_custom_call.1} parent=5 // pred_check_branch
        %386 = sbr.rel (%p384) target = $region48
      $region47: #{tpu_custom_call.1} parent=5 // pred_region
        // Predicated region
        $region49: #{tpu_custom_call.1} parent=47 // pred_check
          %p387 = pneg %p48
        $region50: #{tpu_custom_call.1} parent=47 // pred_check_branch
          %389 = sbr.rel (%p387) target = $region52
        $region51: #{tpu_custom_call.1} parent=47 // pred_region
          %s390 = sand.u32 %s38, 1
          %s391 = scalar_lea.sflag [#allocation3], %s390
          %s392 = sand.u32 %s38, 1
          %s393 = smul.addr %s392, 8
          %s394 = scalar_lea.vmem [#allocation2], %s393
          %396 = vsyncadd %s391, 0
          %s397 = smul.addr %s28, 8
          %s398 = scalar_lea.hbm %s0, %s397
          %s400 = sshll.u32 %s398, 4
          %s401 = int_to_ptr.hbm [resolvable:$true] %s400
          %s402 = sshll.u32 %s394, 4
          %s403 = int_to_ptr.vmem [resolvable:$true] %s402
          %405 = dma.hbm_to_vmem [thread:$0]  %s401, 128, %s403, %s391
        $region52: #{tpu_custom_call.1} parent=47 // pred_fallthru
          _
        // Predicated region
        $region53: #{tpu_custom_call.1} parent=47 // pred_check
          %p406 = pneg %p74
        $region54: #{tpu_custom_call.1} parent=47 // pred_check_branch
          %408 = sbr.rel (%p406) target = $region56
        $region55: #{tpu_custom_call.1} parent=47 // pred_region
          %s409 = sand.u32 %s28, 1
          %s410 = scalar_lea.sflag [#allocation6], %s409
          %s411 = sand.u32 %s64, 1
          %s412 = smul.addr %s411, 16
          %s413 = scalar_lea.vmem [#allocation5], %s412
          %415 = vsyncadd %s410, 0
          %s416 = smul.addr %s28, 2
          %s417 = smul.addr %s416, 8
          %s418 = scalar_lea.hbm %s1, %s417
          %s419 = sshll.u32 %s418, 4
          %s420 = int_to_ptr.hbm [resolvable:$true] %s419
          %s421 = sshll.u32 %s413, 4
          %s422 = int_to_ptr.vmem [resolvable:$true] %s421
          %427 = dma.hbm_to_vmem [thread:$0]  %s420, 256, %s422, %s410, 128, 128, 8
        $region56: #{tpu_custom_call.1} parent=47 // pred_fallthru
          _
        // Predicated region
        $region57: #{tpu_custom_call.1} parent=47 // pred_check
          %p428 = pneg %p100
        $region58: #{tpu_custom_call.1} parent=47 // pred_check_branch
          %430 = sbr.rel (%p428) target = $region60
        $region59: #{tpu_custom_call.1} parent=47 // pred_region
          %s431 = sand.u32 %s28, 1
          %s432 = scalar_lea.sflag [#allocation6], %s431
          %s433 = sand.u32 %s90, 1
          %s434 = smul.addr %s433, 16
          %s435 = scalar_lea.vmem [#allocation7], %s434
          %437 = vsyncadd %s432, 0
          %s438 = smul.addr %s28, 2
          %s439 = smul.addr %s438, 8
          %s440 = scalar_lea.hbm %s2, %s439
          %s441 = sshll.u32 %s440, 4
          %s442 = int_to_ptr.hbm [resolvable:$true] %s441
          %s443 = sshll.u32 %s435, 4
          %s444 = int_to_ptr.vmem [resolvable:$true] %s443
          %449 = dma.hbm_to_vmem [thread:$0]  %s442, 256, %s444, %s432, 128, 128, 8
        $region60: #{tpu_custom_call.1} parent=47 // pred_fallthru
          _
      $region48: #{tpu_custom_call.1} parent=5 // pred_fallthru
        _
      %p450 = scmp.le.s32.totalorder 1, %s28
      %p451 = scmp.lt.s32.totalorder %s28, 3
      %p452 = pnand %p450, %p451
      %p453 = pneg %p452
      // Predicated region
      $region61: #{tpu_custom_call.1} parent=5 // pred_check
        _
      $region62: #{tpu_custom_call.1} parent=5 // pred_check_branch
        %455 = sbr.rel (%p452) target = $region64
      $region63: #{tpu_custom_call.1} parent=5 // pred_region
        %s456 = ssub.s32 %s28, 1
        %s457 = sand.u32 %s41, 1
        %s458 = scalar_lea.sflag [#allocation3], %s457
        %s459 = sand.u32 %s41, 1
        %s460 = smul.addr %s459, 8
        %s461 = scalar_lea.vmem [#allocation2], %s460
        // Predicated region
        $region65: #{tpu_custom_call.1} parent=63 // pred_check
          %p462 = pneg %p54
        $region66: #{tpu_custom_call.1} parent=63 // pred_check_branch
          %464 = sbr.rel (%p462) target = $region68
        $region67: #{tpu_custom_call.1} parent=63 // pred_region
          %466 = dma.done %s458, 128
        $region68: #{tpu_custom_call.1} parent=63 // pred_fallthru
          _
        %s467 = sand.u32 %s33, 1
        %s468 = scalar_lea.sflag [#allocation6], %s467
        %s469 = sand.u32 %s67, 1
        %s470 = smul.addr %s469, 16
        %s471 = scalar_lea.vmem [#allocation5], %s470
        // Predicated region
        $region69: #{tpu_custom_call.1} parent=63 // pred_check
          %p472 = pneg %p80
        $region70: #{tpu_custom_call.1} parent=63 // pred_check_branch
          %474 = sbr.rel (%p472) target = $region72
        $region71: #{tpu_custom_call.1} parent=63 // pred_region
          %476 = dma.done %s468, 256
        $region72: #{tpu_custom_call.1} parent=63 // pred_fallthru
          _
        %s477 = sand.u32 %s33, 1
        %s478 = scalar_lea.sflag [#allocation6], %s477
        %s479 = sand.u32 %s93, 1
        %s480 = smul.addr %s479, 16
        %s481 = scalar_lea.vmem [#allocation7], %s480
        // Predicated region
        $region73: #{tpu_custom_call.1} parent=63 // pred_check
          %p482 = pneg %p106
        $region74: #{tpu_custom_call.1} parent=63 // pred_check_branch
          %484 = sbr.rel (%p482) target = $region76
        $region75: #{tpu_custom_call.1} parent=63 // pred_region
          %486 = dma.done %s478, 256
        $region76: #{tpu_custom_call.1} parent=63 // pred_fallthru
          _
        // Predicated region
        $region77: #{tpu_custom_call.1} parent=63 // pred_check
          %p487 = pneg %p127
        $region78: #{tpu_custom_call.1} parent=63 // pred_check_branch
          %489 = sbr.rel (%p487) target = $region80
        $region79: #{tpu_custom_call.1} parent=63 // pred_region
          %491 = dma.done [#allocation9], 512
        $region80: #{tpu_custom_call.1} parent=63 // pred_fallthru
          _
        // Predicated region
        $region81: #{tpu_custom_call.1} parent=63 // pred_check
          %p492 = pneg %p169
        $region82: #{tpu_custom_call.1} parent=63 // pred_check_branch
          %494 = sbr.rel (%p492) target = $region84
        $region83: #{tpu_custom_call.1} parent=63 // pred_region
          %496 = dma.done [#allocation9], 512
        $region84: #{tpu_custom_call.1} parent=63 // pred_fallthru
          _
        // Predicated region
        $region85: #{tpu_custom_call.1} parent=63 // pred_check
          %p497 = pneg %p211
        $region86: #{tpu_custom_call.1} parent=63 // pred_check_branch
          %499 = sbr.rel (%p497) target = $region88
        $region87: #{tpu_custom_call.1} parent=63 // pred_region
          %501 = dma.done [#allocation12], 512
        $region88: #{tpu_custom_call.1} parent=63 // pred_fallthru
          _
        // Predicated region
        $region89: #{tpu_custom_call.1} parent=63 // pred_check
          %p502 = pneg %p253
        $region90: #{tpu_custom_call.1} parent=63 // pred_check_branch
          %504 = sbr.rel (%p502) target = $region92
        $region91: #{tpu_custom_call.1} parent=63 // pred_region
          %506 = dma.done [#allocation12], 512
        $region92: #{tpu_custom_call.1} parent=63 // pred_fallthru
          _
        %s507 = sand.u32 %s41, 1
        %s508 = scalar_lea.sflag [#allocation3], %s507
        %s509 = sand.u32 %s41, 1
        %s510 = smul.addr %s509, 8
        %s511 = scalar_lea.vmem [#allocation2], %s510
        %p512 = pneg %p54
        %p513 = pneg %p51
        %s514 = sand.u32 %s33, 1
        %s515 = scalar_lea.sflag [#allocation6], %s514
        %s516 = sand.u32 %s67, 1
        %s517 = smul.addr %s516, 16
        %s518 = scalar_lea.vmem [#allocation5], %s517
        %p519 = pneg %p80
        %p520 = pneg %p77
        %s521 = sand.u32 %s33, 1
        %s522 = scalar_lea.sflag [#allocation6], %s521
        %s523 = sand.u32 %s93, 1
        %s524 = smul.addr %s523, 16
        %s525 = scalar_lea.vmem [#allocation7], %s524
        %p526 = pneg %p106
        %p527 = pneg %p103
        %p528 = pneg %p127
        %p529 = pneg %p124
        %p530 = pneg %p148
        %p531 = pneg %p145
        %p532 = pneg %p169
        %p533 = pneg %p166
        %p534 = pneg %p190
        %p535 = pneg %p187
        %p536 = pneg %p211
        %p537 = pneg %p208
        %p538 = pneg %p232
        %p539 = pneg %p229
        %p540 = pneg %p253
        %p541 = pneg %p250
        %p542 = pneg %p274
        %p543 = pneg %p271
        %p544 = pneg %p300
        %p545 = pneg %p297
        %s546 = sand.u32 %s287, 1
        %s547 = scalar_lea.sflag [#allocation4], %s546
        %s548 = sand.u32 %s287, 1
        %s549 = smul.addr %s548, 8
        %s550 = scalar_lea.vmem [#allocation14], %s549
        %v551 = vld [vmem:[#allocation8] sm:$0xff]
        %v552 = vld [vmem:[#allocation8 + $0x8] sm:$0xff]
        %v553 = vld [vmem:[#allocation8 + $0x10] sm:$0xff]
        %v554 = vld [vmem:[#allocation8 + $0x18] sm:$0xff]
        %v555 = vld [vmem:[#allocation10] sm:$0xff]
        %v556 = vld [vmem:[#allocation10 + $0x8] sm:$0xff]
        %v557 = vld [vmem:[#allocation10 + $0x10] sm:$0xff]
        %v558 = vld [vmem:[#allocation10 + $0x18] sm:$0xff]
        %v559 = vld [vmem:[#allocation11] sm:$0xff]
        %v560 = vld [vmem:[#allocation11 + $0x8] sm:$0xff]
        %v561 = vld [vmem:[#allocation11 + $0x10] sm:$0xff]
        %v562 = vld [vmem:[#allocation11 + $0x18] sm:$0xff]
        %v563 = vld [vmem:[#allocation13] sm:$0xff]
        %v564 = vld [vmem:[#allocation13 + $0x8] sm:$0xff]
        %v565 = vld [vmem:[#allocation13 + $0x10] sm:$0xff]
        %v566 = vld [vmem:[#allocation13 + $0x18] sm:$0xff]
        %v567 = vld [vmem:[%s4] sm:$0x1]
        %v568 = vld [vmem:[%s6] sm:$0x1]
        %v569 = vld [vmem:[%s8] sm:$0x1]
        %v570 = vld [vmem:[%s10] sm:$0x1]
        %v571 = vld [vmem:[%s461] sm:$0xff]
        %v572 = vld [vmem:[%s471] sm:$0xff]
        %v573 = vld [vmem:[%s471 + $0x8] sm:$0xff]
        %v574 = vld [vmem:[%s481] sm:$0xff]
        %v575 = vld [vmem:[%s481 + $0x8] sm:$0xff]
        %v577 = vperm.slane %v567, 0
        %vm579 = vcmask 261120
        %v581 = vsel %vm579, %v571, 0
        %583 = vmatpush.msra.mxu0 0.0
        %584 = vmatpush.msra.mxu0 0.0
        %585 = vmatpush.msra.mxu0 0.0
        %586 = vmatpush.msra.mxu0 0.0
        %587 = vmatpush.msra.mxu0 0.0
        %588 = vmatpush.msra.mxu0 0.0
        %589 = vmatpush.msra.mxu0 0.0
        %590 = vmatpush.msra.mxu0 0.0
        %591 = vmatpush.msra.mxu0 0.0
        %592 = vmatpush.msra.mxu0 0.0
        %593 = vmatpush.msra.mxu0 0.0
        %594 = vmatpush.msra.mxu0 0.0
        %595 = vmatpush.msra.mxu0 %v554
        %596 = vmatpush.msra.mxu0 %v553
        %597 = vmatpush.msra.mxu0 %v552
        %598 = vmatpush.msra.mxu0 %v551
        %599 = vmatmul.f32.gmra.mxu0 %v581
        %v600 = vpop.f32.mrf.mxu0
        %v601 = vadd.f32 %v577, %v600
        %602 = vdwg.mxu0
        %v604 = vperm.slane %v568, 0
        %v607 = vsel %vm579, %v572, 0
        %v610 = vsel %vm579, %v573, 0
        %612 = vmatpush.msra.mxu0 0.0
        %613 = vmatpush.msra.mxu0 0.0
        %614 = vmatpush.msra.mxu0 0.0
        %615 = vmatpush.msra.mxu0 0.0
        %616 = vmatpush.msra.mxu0 0.0
        %617 = vmatpush.msra.mxu0 0.0
        %618 = vmatpush.msra.mxu0 0.0
        %619 = vmatpush.msra.mxu0 0.0
        %620 = vmatpush.msra.mxu0 0.0
        %621 = vmatpush.msra.mxu0 0.0
        %622 = vmatpush.msra.mxu0 0.0
        %623 = vmatpush.msra.mxu0 0.0
        %624 = vmatpush.msra.mxu0 %v558
        %625 = vmatpush.msra.mxu0 %v557
        %626 = vmatpush.msra.mxu0 %v556
        %627 = vmatpush.msra.mxu0 %v555
        %628 = vmatmul.f32.gmra.mxu0 %v607
        %v629 = vpop.f32.mrf.mxu0
        %v630 = vadd.f32 %v604, %v629
        %631 = vmatmul.f32.gmra.mxu0 %v610
        %v632 = vpop.f32.mrf.mxu0
        %v633 = vadd.f32 %v604, %v632
        %634 = vdwg.mxu0
        %v636 = vperm.slane %v569, 0
        %v639 = vsel %vm579, %v574, 0
        %v642 = vsel %vm579, %v575, 0
        %644 = vmatpush.msra.mxu0 0.0
        %645 = vmatpush.msra.mxu0 0.0
        %646 = vmatpush.msra.mxu0 0.0
        %647 = vmatpush.msra.mxu0 0.0
        %648 = vmatpush.msra.mxu0 0.0
        %649 = vmatpush.msra.mxu0 0.0
        %650 = vmatpush.msra.mxu0 0.0
        %651 = vmatpush.msra.mxu0 0.0
        %652 = vmatpush.msra.mxu0 0.0
        %653 = vmatpush.msra.mxu0 0.0
        %654 = vmatpush.msra.mxu0 0.0
        %655 = vmatpush.msra.mxu0 0.0
        %656 = vmatpush.msra.mxu0 %v562
        %657 = vmatpush.msra.mxu0 %v561
        %658 = vmatpush.msra.mxu0 %v560
        %659 = vmatpush.msra.mxu0 %v559
        %660 = vmatmul.f32.gmra.mxu0 %v639
        %v661 = vpop.f32.mrf.mxu0
        %v662 = vadd.f32 %v636, %v661
        %663 = vmatmul.f32.gmra.mxu0 %v642
        %v664 = vpop.f32.mrf.mxu0
        %v665 = vadd.f32 %v636, %v664
        %666 = vdwg.mxu0
        %v667 = vmul.f32 %v601, 0.35355338
        %vm668 = vcmask 64512
        %v670 = vsel %vm668, %v667, 0
        %v673 = vsel %vm668, %v630, 0
        %v676 = vsel %vm668, %v633, 0
        %678 = vmatpush.xpose.msra.mxu0 0.0
        %679 = vmatpush.xpose.msra.mxu0 0.0
        %680 = vmatpush.xpose.msra.mxu0 0.0
        %681 = vmatpush.xpose.msra.mxu0 0.0
        %682 = vmatpush.xpose.msra.mxu0 0.0
        %683 = vmatpush.xpose.msra.mxu0 0.0
        %684 = vmatpush.xpose.msra.mxu0 0.0
        %685 = vmatpush.xpose.msra.mxu0 0.0
        %686 = vmatpush.xpose.msra.mxu0 0.0
        %687 = vmatpush.xpose.msra.mxu0 0.0
        %688 = vmatpush.xpose.msra.mxu0 0.0
        %689 = vmatpush.xpose.msra.mxu0 0.0
        %690 = vmatpush.xpose.msra.mxu0 0.0
        %691 = vmatpush.xpose.msra.mxu0 0.0
        %692 = vmatpush.xpose.msra.mxu0 %v676
        %693 = vmatpush.xpose.msra.mxu0 %v673
        %694 = vmatmul.f32.gmra.mxu0 %v670
        %v695 = vpop.f32.mrf.mxu0
        %v696 = vadd.f32 0.0, %v695
        %697 = vdwg.mxu0
        %vm698 = vcmask 130048
        %v699 = vsel %vm698, %v696, -inf
        %700 = vmax.xlane.f32.xlu0 %v699
        %v701 = vpop.xlane.xlu0 %700
        %v702 = vsub.f32 %v696, %v701
        %v703 = vmul.f32 %v702, 1.442695
        %v704 = vpow.pop %v703
        %v705 = vsel %vm698, %v704, 0.0
        %706 = vadd.xlane.f32.xlu0 %v705
        %v707 = vpop.xlane.xlu0 %706
        %v708 = vrcp.pop %v707
        %v709 = vmul.f32 %v707, %v708
        %v710 = vsub.f32 1.0, %v709
        %v711 = vmul.f32 %v708, %v710
        %v712 = vadd.f32 %v708, %v711
        %vm713 = vweird.f32 %v707
        %vm714 = vweird.f32 %v708
        %vm715 = vmor %vm713, %vm714
        %v716 = vsel %vm715, %v708, %v712
        %v717 = vand.u32 2147483647, %v707
        %vm718 = vcmp.eq.f32.partialorder %v717, 8.507059e+37
        %v719 = vand.u32 %v707, 2147483648
        %v720 = vor.u32 1.1754944e-38, %v719
        %v721 = vsel %vm718, %v720, %v716
        %v722 = vmul.f32 %v704, %v721
        %v724 = vsel %vm698, %v722, 0
        %726 = vmatpush.msra.mxu0 0.0
        %727 = vmatpush.msra.mxu0 0.0
        %728 = vmatpush.msra.mxu0 0.0
        %729 = vmatpush.msra.mxu0 0.0
        %730 = vmatpush.msra.mxu0 0.0
        %731 = vmatpush.msra.mxu0 0.0
        %732 = vmatpush.msra.mxu0 0.0
        %733 = vmatpush.msra.mxu0 0.0
        %734 = vmatpush.msra.mxu0 0.0
        %735 = vmatpush.msra.mxu0 0.0
        %736 = vmatpush.msra.mxu0 0.0
        %737 = vmatpush.msra.mxu0 0.0
        %738 = vmatpush.msra.mxu0 0.0
        %739 = vmatpush.msra.mxu0 0.0
        %740 = vmatpush.msra.mxu0 %v665
        %741 = vmatpush.msra.mxu0 %v662
        %742 = vmatmul.f32.gmra.mxu0 %v724
        %v743 = vpop.f32.mrf.mxu0
        %v744 = vadd.f32 0.0, %v743
        %745 = vdwg.mxu0
        %746 = vrot.lane.b32.xlu0 %v667, 120
        %v747 = vpop.permute.xlu0 %746
        %748 = vrot.lane.b32.xlu0 %v630, 120
        %v749 = vpop.permute.xlu0 %748
        %750 = vrot.lane.b32.xlu0 %v633, 120
        %v751 = vpop.permute.xlu0 %750
        %v752 = vsel %vm668, %v747, 0
        %v754 = vsel %vm668, %v749, 0
        %v756 = vsel %vm668, %v751, 0
        %758 = vmatpush.xpose.msra.mxu0 0.0
        %759 = vmatpush.xpose.msra.mxu0 0.0
        %760 = vmatpush.xpose.msra.mxu0 0.0
        %761 = vmatpush.xpose.msra.mxu0 0.0
        %762 = vmatpush.xpose.msra.mxu0 0.0
        %763 = vmatpush.xpose.msra.mxu0 0.0
        %764 = vmatpush.xpose.msra.mxu0 0.0
        %765 = vmatpush.xpose.msra.mxu0 0.0
        %766 = vmatpush.xpose.msra.mxu0 0.0
        %767 = vmatpush.xpose.msra.mxu0 0.0
        %768 = vmatpush.xpose.msra.mxu0 0.0
        %769 = vmatpush.xpose.msra.mxu0 0.0
        %770 = vmatpush.xpose.msra.mxu0 0.0
        %771 = vmatpush.xpose.msra.mxu0 0.0
        %772 = vmatpush.xpose.msra.mxu0 %v756
        %773 = vmatpush.xpose.msra.mxu0 %v754
        %774 = vmatmul.f32.gmra.mxu0 %v752
        %v775 = vpop.f32.mrf.mxu0
        %v776 = vadd.f32 0.0, %v775
        %777 = vdwg.mxu0
        %v778 = vsel %vm698, %v776, -inf
        %779 = vmax.xlane.f32.xlu0 %v778
        %v780 = vpop.xlane.xlu0 %779
        %v781 = vsub.f32 %v776, %v780
        %v782 = vmul.f32 %v781, 1.442695
        %v783 = vpow.pop %v782
        %v784 = vsel %vm698, %v783, 0.0
        %785 = vadd.xlane.f32.xlu0 %v784
        %v786 = vpop.xlane.xlu0 %785
        %v787 = vrcp.pop %v786
        %v788 = vmul.f32 %v786, %v787
        %v789 = vsub.f32 1.0, %v788
        %v790 = vmul.f32 %v787, %v789
        %v791 = vadd.f32 %v787, %v790
        %vm792 = vweird.f32 %v786
        %vm793 = vweird.f32 %v787
        %vm794 = vmor %vm792, %vm793
        %v795 = vsel %vm794, %v787, %v791
        %v796 = vand.u32 2147483647, %v786
        %vm797 = vcmp.eq.f32.partialorder %v796, 8.507059e+37
        %v798 = vand.u32 %v786, 2147483648
        %v799 = vor.u32 1.1754944e-38, %v798
        %v800 = vsel %vm797, %v799, %v795
        %v801 = vmul.f32 %v783, %v800
        %804 = vrot.lane.b32.xlu0 %v662, 120
        %v805 = vpop.permute.xlu0 %804
        %806 = vrot.lane.b32.xlu0 %v665, 120
        %v807 = vpop.permute.xlu0 %806
        %v811 = vsel %vm698, %v801, 0
        %813 = vmatpush.msra.mxu0 0.0
        %814 = vmatpush.msra.mxu0 0.0
        %815 = vmatpush.msra.mxu0 0.0
        %816 = vmatpush.msra.mxu0 0.0
        %817 = vmatpush.msra.mxu0 0.0
        %818 = vmatpush.msra.mxu0 0.0
        %819 = vmatpush.msra.mxu0 0.0
        %820 = vmatpush.msra.mxu0 0.0
        %821 = vmatpush.msra.mxu0 0.0
        %822 = vmatpush.msra.mxu0 0.0
        %823 = vmatpush.msra.mxu0 0.0
        %824 = vmatpush.msra.mxu0 0.0
        %825 = vmatpush.msra.mxu0 0.0
        %826 = vmatpush.msra.mxu0 0.0
        %827 = vmatpush.msra.mxu0 %v807
        %828 = vmatpush.msra.mxu0 %v805
        %829 = vmatmul.f32.gmra.mxu0 %v811
        %v830 = vpop.f32.mrf.mxu0
        %v831 = vadd.f32 0.0, %v830
        %832 = vdwg.mxu0
        %833 = vrot.lane.b32.xlu0 %v667, 112
        %v834 = vpop.permute.xlu0 %833
        %835 = vrot.lane.b32.xlu0 %v630, 112
        %v836 = vpop.permute.xlu0 %835
        %837 = vrot.lane.b32.xlu0 %v633, 112
        %v838 = vpop.permute.xlu0 %837
        %v839 = vsel %vm668, %v834, 0
        %v841 = vsel %vm668, %v836, 0
        %v843 = vsel %vm668, %v838, 0
        %845 = vmatpush.xpose.msra.mxu0 0.0
        %846 = vmatpush.xpose.msra.mxu0 0.0
        %847 = vmatpush.xpose.msra.mxu0 0.0
        %848 = vmatpush.xpose.msra.mxu0 0.0
        %849 = vmatpush.xpose.msra.mxu0 0.0
        %850 = vmatpush.xpose.msra.mxu0 0.0
        %851 = vmatpush.xpose.msra.mxu0 0.0
        %852 = vmatpush.xpose.msra.mxu0 0.0
        %853 = vmatpush.xpose.msra.mxu0 0.0
        %854 = vmatpush.xpose.msra.mxu0 0.0
        %855 = vmatpush.xpose.msra.mxu0 0.0
        %856 = vmatpush.xpose.msra.mxu0 0.0
        %857 = vmatpush.xpose.msra.mxu0 0.0
        %858 = vmatpush.xpose.msra.mxu0 0.0
        %859 = vmatpush.xpose.msra.mxu0 %v843
        %860 = vmatpush.xpose.msra.mxu0 %v841
        %861 = vmatmul.f32.gmra.mxu0 %v839
        %v862 = vpop.f32.mrf.mxu0
        %v863 = vadd.f32 0.0, %v862
        %864 = vdwg.mxu0
        %v865 = vsel %vm698, %v863, -inf
        %866 = vmax.xlane.f32.xlu0 %v865
        %v867 = vpop.xlane.xlu0 %866
        %v868 = vsub.f32 %v863, %v867
        %v869 = vmul.f32 %v868, 1.442695
        %v870 = vpow.pop %v869
        %v871 = vsel %vm698, %v870, 0.0
        %872 = vadd.xlane.f32.xlu0 %v871
        %v873 = vpop.xlane.xlu0 %872
        %v874 = vrcp.pop %v873
        %v875 = vmul.f32 %v873, %v874
        %v876 = vsub.f32 1.0, %v875
        %v877 = vmul.f32 %v874, %v876
        %v878 = vadd.f32 %v874, %v877
        %vm879 = vweird.f32 %v873
        %vm880 = vweird.f32 %v874
        %vm881 = vmor %vm879, %vm880
        %v882 = vsel %vm881, %v874, %v878
        %v883 = vand.u32 2147483647, %v873
        %vm884 = vcmp.eq.f32.partialorder %v883, 8.507059e+37
        %v885 = vand.u32 %v873, 2147483648
        %v886 = vor.u32 1.1754944e-38, %v885
        %v887 = vsel %vm884, %v886, %v882
        %v888 = vmul.f32 %v870, %v887
        %889 = vrot.lane.b32.xlu0 %v662, 112
        %v890 = vpop.permute.xlu0 %889
        %891 = vrot.lane.b32.xlu0 %v665, 112
        %v892 = vpop.permute.xlu0 %891
        %v896 = vsel %vm698, %v888, 0
        %898 = vmatpush.msra.mxu0 0.0
        %899 = vmatpush.msra.mxu0 0.0
        %900 = vmatpush.msra.mxu0 0.0
        %901 = vmatpush.msra.mxu0 0.0
        %902 = vmatpush.msra.mxu0 0.0
        %903 = vmatpush.msra.mxu0 0.0
        %904 = vmatpush.msra.mxu0 0.0
        %905 = vmatpush.msra.mxu0 0.0
        %906 = vmatpush.msra.mxu0 0.0
        %907 = vmatpush.msra.mxu0 0.0
        %908 = vmatpush.msra.mxu0 0.0
        %909 = vmatpush.msra.mxu0 0.0
        %910 = vmatpush.msra.mxu0 0.0
        %911 = vmatpush.msra.mxu0 0.0
        %912 = vmatpush.msra.mxu0 %v892
        %913 = vmatpush.msra.mxu0 %v890
        %914 = vmatmul.f32.gmra.mxu0 %v896
        %v915 = vpop.f32.mrf.mxu0
        %v916 = vadd.f32 0.0, %v915
        %917 = vdwg.mxu0
        %918 = vrot.lane.b32.xlu0 %v667, 104
        %v919 = vpop.permute.xlu0 %918
        %920 = vrot.lane.b32.xlu0 %v630, 104
        %v921 = vpop.permute.xlu0 %920
        %922 = vrot.lane.b32.xlu0 %v633, 104
        %v923 = vpop.permute.xlu0 %922
        %v924 = vsel %vm668, %v919, 0
        %v926 = vsel %vm668, %v921, 0
        %v928 = vsel %vm668, %v923, 0
        %930 = vmatpush.xpose.msra.mxu0 0.0
        %931 = vmatpush.xpose.msra.mxu0 0.0
        %932 = vmatpush.xpose.msra.mxu0 0.0
        %933 = vmatpush.xpose.msra.mxu0 0.0
        %934 = vmatpush.xpose.msra.mxu0 0.0
        %935 = vmatpush.xpose.msra.mxu0 0.0
        %936 = vmatpush.xpose.msra.mxu0 0.0
        %937 = vmatpush.xpose.msra.mxu0 0.0
        %938 = vmatpush.xpose.msra.mxu0 0.0
        %939 = vmatpush.xpose.msra.mxu0 0.0
        %940 = vmatpush.xpose.msra.mxu0 0.0
        %941 = vmatpush.xpose.msra.mxu0 0.0
        %942 = vmatpush.xpose.msra.mxu0 0.0
        %943 = vmatpush.xpose.msra.mxu0 0.0
        %944 = vmatpush.xpose.msra.mxu0 %v928
        %945 = vmatpush.xpose.msra.mxu0 %v926
        %946 = vmatmul.f32.gmra.mxu0 %v924
        %v947 = vpop.f32.mrf.mxu0
        %v948 = vadd.f32 0.0, %v947
        %949 = vdwg.mxu0
        %v950 = vsel %vm698, %v948, -inf
        %951 = vmax.xlane.f32.xlu0 %v950
        %v952 = vpop.xlane.xlu0 %951
        %v953 = vsub.f32 %v948, %v952
        %v954 = vmul.f32 %v953, 1.442695
        %v955 = vpow.pop %v954
        %v956 = vsel %vm698, %v955, 0.0
        %957 = vadd.xlane.f32.xlu0 %v956
        %v958 = vpop.xlane.xlu0 %957
        %v959 = vrcp.pop %v958
        %v960 = vmul.f32 %v958, %v959
        %v961 = vsub.f32 1.0, %v960
        %v962 = vmul.f32 %v959, %v961
        %v963 = vadd.f32 %v959, %v962
        %vm964 = vweird.f32 %v958
        %vm965 = vweird.f32 %v959
        %vm966 = vmor %vm964, %vm965
        %v967 = vsel %vm966, %v959, %v963
        %v968 = vand.u32 2147483647, %v958
        %vm969 = vcmp.eq.f32.partialorder %v968, 8.507059e+37
        %v970 = vand.u32 %v958, 2147483648
        %v971 = vor.u32 1.1754944e-38, %v970
        %v972 = vsel %vm969, %v971, %v967
        %v973 = vmul.f32 %v955, %v972
        %974 = vrot.lane.b32.xlu0 %v662, 104
        %v975 = vpop.permute.xlu0 %974
        %976 = vrot.lane.b32.xlu0 %v665, 104
        %v977 = vpop.permute.xlu0 %976
        %v981 = vsel %vm698, %v973, 0
        %983 = vmatpush.msra.mxu0 0.0
        %984 = vmatpush.msra.mxu0 0.0
        %985 = vmatpush.msra.mxu0 0.0
        %986 = vmatpush.msra.mxu0 0.0
        %987 = vmatpush.msra.mxu0 0.0
        %988 = vmatpush.msra.mxu0 0.0
        %989 = vmatpush.msra.mxu0 0.0
        %990 = vmatpush.msra.mxu0 0.0
        %991 = vmatpush.msra.mxu0 0.0
        %992 = vmatpush.msra.mxu0 0.0
        %993 = vmatpush.msra.mxu0 0.0
        %994 = vmatpush.msra.mxu0 0.0
        %995 = vmatpush.msra.mxu0 0.0
        %996 = vmatpush.msra.mxu0 0.0
        %997 = vmatpush.msra.mxu0 %v977
        %998 = vmatpush.msra.mxu0 %v975
        %999 = vmatmul.f32.gmra.mxu0 %v981
        %v1000 = vpop.f32.mrf.mxu0
        %v1001 = vadd.f32 0.0, %v1000
        %1002 = vdwg.mxu0
        %1004 = vrot.lane.b32.xlu0 %v831, 8
        %v1005 = vpop.permute.xlu0 %1004
        %1008 = vrot.lane.b32.xlu0 %v916, 16
        %v1009 = vpop.permute.xlu0 %1008
        %1012 = vrot.lane.b32.xlu0 %v1001, 24
        %v1013 = vpop.permute.xlu0 %1012
        %v1015 = vsel %vm668, %v744, %v1005
        %v1016 = vsel %vm698, %v1015, %v1009
        %vm1017 = vcmask 195584
        %v1018 = vsel %vm1017, %v1016, %v1013
        %v1020 = vperm.slane %v570, 0
        %v1023 = vsel %vm579, %v1018, 0
        %1025 = vmatpush.msra.mxu0 0.0
        %1026 = vmatpush.msra.mxu0 0.0
        %1027 = vmatpush.msra.mxu0 0.0
        %1028 = vmatpush.msra.mxu0 0.0
        %1029 = vmatpush.msra.mxu0 0.0
        %1030 = vmatpush.msra.mxu0 0.0
        %1031 = vmatpush.msra.mxu0 0.0
        %1032 = vmatpush.msra.mxu0 0.0
        %1033 = vmatpush.msra.mxu0 0.0
        %1034 = vmatpush.msra.mxu0 0.0
        %1035 = vmatpush.msra.mxu0 0.0
        %1036 = vmatpush.msra.mxu0 0.0
        %1037 = vmatpush.msra.mxu0 %v566
        %1038 = vmatpush.msra.mxu0 %v565
        %1039 = vmatpush.msra.mxu0 %v564
        %1040 = vmatpush.msra.mxu0 %v563
        %1041 = vmatmul.f32.gmra.mxu0 %v1023
        %v1042 = vpop.f32.mrf.mxu0
        %v1043 = vadd.f32 %v1020, %v1042
        %1044 = vdwg.mxu0
        %1045 = vst.msk [vmem:[%s550] sm:$0xff] %vm579, %v1043
        %s1046 = sand.u32 %s287, 1
        %s1047 = scalar_lea.sflag [#allocation4], %s1046
        %s1048 = sand.u32 %s287, 1
        %s1049 = smul.addr %s1048, 8
        %s1050 = scalar_lea.vmem [#allocation14], %s1049
        // Predicated region
        $region93: #{tpu_custom_call.1} parent=63 // pred_check
          %p1051 = pneg %p297
        $region94: #{tpu_custom_call.1} parent=63 // pred_check_branch
          %1053 = sbr.rel (%p1051) target = $region96
        $region95: #{tpu_custom_call.1} parent=63 // pred_region
          %1055 = vsyncadd %s1047, 0
          %s1056 = smul.addr %s33, 8
          %s1057 = scalar_lea.hbm %s11, %s1056
          %s1059 = sshll.u32 %s1050, 4
          %s1060 = int_to_ptr.vmem [resolvable:$true] %s1059
          %s1061 = sshll.u32 %s1057, 4
          %s1062 = int_to_ptr.hbm [resolvable:$true] %s1061
          %1064 = dma.vmem_to_hbm [thread:$0]  %s1060, 128, %s1062, %s1047
        $region96: #{tpu_custom_call.1} parent=63 // pred_fallthru
          _
      $region64: #{tpu_custom_call.1} parent=5 // pred_fallthru
        _
      %p1065 = scmp.le.s32.totalorder 2, %s28
      // Predicated region
      $region97: #{tpu_custom_call.1} parent=5 // pred_check
        %p1066 = pneg %p1065
      $region98: #{tpu_custom_call.1} parent=5 // pred_check_branch
        %1068 = sbr.rel (%p1066) target = $region100
      $region99: #{tpu_custom_call.1} parent=5 // pred_region
        %s1069 = ssub.s32 %s28, 2
        // Predicated region
        $region101: #{tpu_custom_call.1} parent=99 // pred_check
          %p1070 = pneg %p303
        $region102: #{tpu_custom_call.1} parent=99 // pred_check_branch
          %1072 = sbr.rel (%p1070) target = $region104
        $region103: #{tpu_custom_call.1} parent=99 // pred_region
          %s1073 = sand.u32 %s288, 1
          %s1074 = scalar_lea.sflag [#allocation4], %s1073
          %s1075 = sand.u32 %s288, 1
          %s1076 = smul.addr %s1075, 8
          %s1077 = scalar_lea.vmem [#allocation14], %s1076
          %1079 = dma.done %s1074, 128
        $region104: #{tpu_custom_call.1} parent=99 // pred_fallthru
          _
      $region100: #{tpu_custom_call.1} parent=5 // pred_fallthru
        _
    $region6: #{tpu_custom_call.1} parent=1 // loop_footer
      %s32 = sadd.s32 1, %s28
    $region7: #{tpu_custom_call.1} parent=1 // loop_footer_branch
      %27 = sbr.rel target = $region3
    $region8: #{tpu_custom_call.1} parent=1 // loop_exit
      _
    %1080 = vsyncpa [#allocation3], 1
    %s1081 = scalar_lea.sflag [#allocation3], 1
    %1082 = vsyncpa %s1081, 1
    %1083 = vsyncpa [#allocation6], 1
    %s1084 = scalar_lea.sflag [#allocation6], 1
    %1085 = vsyncpa %s1084, 1
    %1086 = vsyncpa [#allocation9], 1
    %1087 = vsyncpa [#allocation12], 1
    %1088 = vsyncpa [#allocation4], 1
    %s1089 = scalar_lea.sflag [#allocation4], 1
    %1090 = vsyncpa %s1089, 1

</llo_original>
